<compile_context>
chip_gen: v6e
topology: v6e:2x2x1
jax: 0.10.0
libtpu: 0.0.40
codegen_flags: <defaults>
</compile_context>

<pallas_src>
import jax
import jax.numpy as jnp
from jax import lax
from jax.experimental import pallas as pl
from jax.experimental.pallas import tpu as pltpu


def _round_up(n, m):
    return ((n + m - 1) // m) * m


def _cdiv(a, b):
    return -(-a // b)


def _default_vmem_budget_bytes():
    """Per-core VMEM budget: ~75% of physical, capped at 100 MiB."""
    try:
        cap = int(pltpu.get_tpu_info().vmem_capacity_bytes)
    except Exception:
        cap = 64 * 1024 * 1024  # conservative fallback (v7x per-core size)
    return min((cap * 3) // 4, 100 * 1024 * 1024)


def make_rnn_recurrence_kernel(T, Tc, num_chunks, matmul_dtype):
    """Kernel over grid=(b_blocks, time_chunks); each chunk consumes Tc steps."""
    rem = T - (num_chunks - 1) * Tc  # static, in [1, Tc]

    def rnn_recurrence_kernel(xproj_ref, h0_ref, whh_ref, hid_ref):
        c = pl.program_id(1)

        # Initialize the recurrent state (carried in the resident output block).
        @pl.when(c == 0)
        def _():
            hid_ref[...] = h0_ref[...]

        h_in = hid_ref[...]  # (B_block, H_pad) f32 state

        def run_steps(n_steps, h):
            def step(i, h):
                x_t = xproj_ref[i].astype(jnp.float32)          # (B_block, H_pad)
                z = x_t + jnp.dot(h.astype(matmul_dtype), whh_ref[...],
                                  preferred_element_type=jnp.float32)
                return jnp.tanh(z)

            unroll = True if n_steps <= 16 else 8
            return lax.fori_loop(0, n_steps, step, h, unroll=unroll)

        if rem == Tc:
            # All chunks are full: single unmasked loop, no tail select.
            hid_ref[...] = run_steps(Tc, h_in)
        else:
            @pl.when(c < num_chunks - 1)
            def _():
                hid_ref[...] = run_steps(Tc, h_in)

            @pl.when(c == num_chunks - 1)
            def _():
                hid_ref[...] = run_steps(rem, h_in)   # static shorter tail loop

    return rnn_recurrence_kernel


def gru_module_forward(x, h0, params, *, compute_dtype=jnp.bfloat16,
                       max_time_chunk=512, max_batch_block=256,
                       vmem_budget_bytes=None):
    """x: (T, B, I) f32, h0: (1, B, H) f32. Returns (out (B, O), hidden (1, B, H))."""
    T, B, _I = x.shape
    H = params["w_hh"].shape[0]
    f32 = jnp.float32

    # --- Padded geometry (8,128)-aligned, with optional batch blocking. -------
    B_pad0 = _round_up(B, 8)
    num_b_blocks = _cdiv(B_pad0, max_batch_block)
    B_block = _round_up(_cdiv(B_pad0, num_b_blocks), 8)
    B_pad = num_b_blocks * B_block
    H_pad = _round_up(H, 128)

    # --- VMEM-aware time-chunk size and explicit scoped-VMEM limit. -----------
    itemsize = jnp.dtype(compute_dtype).itemsize
    budget = int(vmem_budget_bytes) if vmem_budget_bytes is not None \
        else _default_vmem_budget_bytes()
    fixed = (3 * H_pad * H_pad * itemsize        # W_hh double buffer + temp
             + 2 * B_block * H_pad * 4           # h0 double buffer
             + 2 * B_block * H_pad * 4           # hidden output double buffer
             + 8 * B_block * H_pad * 4           # per-step f32 temporaries
             + (2 << 20))                        # misc scratch margin
    per_t = 2 * B_block * H_pad * itemsize       # x_proj chunk, double-buffered
    tc_vmem = max(1, (budget - fixed) // per_t)
    Tc = int(max(1, min(T, max_time_chunk, tc_vmem)))
    num_chunks = _cdiv(T, Tc)
    T_pad = num_chunks * Tc

    # --- Hoisted input projection, produced directly at padded shape. ---------
    # Zero padding is load-bearing: padded H lanes of x_proj / h0 and padded
    # rows/cols of W_hh stay exactly zero so they never contaminate real lanes.
    x_p = jnp.pad(x.astype(f32), ((0, T_pad - T), (0, B_pad - B), (0, 0)))
    w_ih_p = jnp.pad(params["w_ih"].astype(f32), ((0, H_pad - H), (0, 0)))
    b_p = jnp.pad((params["b_ih"] + params["b_hh"]).astype(f32), (0, H_pad - H))
    x_proj = (jnp.einsum("tbi,hi->tbh", x_p, w_ih_p,
                         preferred_element_type=f32) + b_p).astype(compute_dtype)

    h0_p = jnp.pad(h0[0].astype(f32), ((0, B_pad - B), (0, H_pad - H)))
    w_hh_t = jnp.pad(params["w_hh"].T.astype(f32),
                     ((0, H_pad - H), (0, H_pad - H))).astype(compute_dtype)

    kernel = make_rnn_recurrence_kernel(T, Tc, num_chunks, compute_dtype)
    grid_spec = pltpu.PrefetchScalarGridSpec(
        num_scalar_prefetch=0,
        grid=(num_b_blocks, num_chunks),
        in_specs=[
            pl.BlockSpec((Tc, B_block, H_pad), lambda b, c: (c, b, 0)),  # X_proj
            pl.BlockSpec((B_block, H_pad), lambda b, c: (b, 0)),         # h0
            pl.BlockSpec((H_pad, H_pad), lambda b, c: (0, 0)),           # W_hh^T
        ],
        out_specs=pl.BlockSpec((B_block, H_pad), lambda b, c: (b, 0)),   # hidden
    )

    hidden_pad = pl.pallas_call(
        kernel,
        out_shape=jax.ShapeDtypeStruct((B_pad, H_pad), f32),
        grid_spec=grid_spec,
        compiler_params=pltpu.CompilerParams(
            # batch blocks are independent (v7x 2nd TC); time chunks are serial.
            dimension_semantics=("parallel", "arbitrary"),
            vmem_limit_bytes=int(budget),
        ),
    )(x_proj, h0_p, w_hh_t)

    # --- One-shot linear head on the final hidden state (plain XLA matmul). ---
    h_T = hidden_pad[:B, :H]                                           # (B, H)
    out = h_T @ params["w_lin"].T.astype(f32) + params["b_lin"]        # (B, O)
    hidden = h_T[None]                                                 # (1, B, H)
    return out, hidden


def reference_forward(x, h0, params):
    """Pure-JAX reference matching PyTorch nn.RNN(tanh) + Linear."""
    h = h0[0]
    for t in range(x.shape[0]):
        h = jnp.tanh(x[t] @ params["w_ih"].T + params["b_ih"]
                     + h @ params["w_hh"].T + params["b_hh"])
    out = h @ params["w_lin"].T + params["b_lin"]
    return out, h[None]


def init_params(key, input_size, hidden_size, output_size):
    ks = jax.random.split(key, 6)
    k_rnn = 1.0 / jnp.sqrt(hidden_size)
    k_lin = 1.0 / jnp.sqrt(hidden_size)
    u = lambda k, shape, a: jax.random.uniform(k, shape, jnp.float32, -a, a)
    return {
        "w_ih": u(ks[0], (hidden_size, input_size), k_rnn),
        "w_hh": u(ks[1], (hidden_size, hidden_size), k_rnn),
        "b_ih": u(ks[2], (hidden_size,), k_rnn),
        "b_hh": u(ks[3], (hidden_size,), k_rnn),
        "w_lin": u(ks[4], (output_size, hidden_size), k_lin),
        "b_lin": u(ks[5], (output_size,), k_lin),
    }


if __name__ == "__main__":
    base_key = jax.random.PRNGKey(0)

    def run_case(T, B, I, H, O, **kw):
        k_x, k_h, k_p = jax.random.split(jax.random.fold_in(base_key, T * 1000 + B), 3)
        x = jax.random.normal(k_x, (T, B, I), jnp.float32)
        h0 = jax.random.normal(k_h, (1, B, H), jnp.float32)
        params = init_params(k_p, I, H, O)
        out, hidden = gru_module_forward(x, h0, params, **kw)
        out, hidden = jax.block_until_ready((out, hidden))
        ref_out, ref_hidden = reference_forward(x, h0, params)
        return out, hidden, ref_out, ref_hidden

    # Case 1a: small module shapes, exact f32 path (tight tolerance).
    o, h, ro, rh = run_case(8, 2, 4, 32, 16, compute_dtype=jnp.float32)
    assert jnp.allclose(o, ro, atol=1e-4, rtol=1e-4), "f32 path: output mismatch"
    assert jnp.allclose(h, rh, atol=1e-4, rtol=1e-4), "f32 path: hidden mismatch"

    # Case 1b: default bf16 streaming/weight path (bf16-level tolerance).
    o, h, ro, rh = run_case(8, 2, 4, 32, 16)
    assert jnp.allclose(o, ro, atol=3e-2, rtol=3e-2), "bf16 path: output mismatch"
    assert jnp.allclose(h, rh, atol=3e-2, rtol=3e-2), "bf16 path: hidden mismatch"

    # Case 2: multi-chunk time axis with a ragged tail (T=37, chunk=16), bf16 path.
    o, h, ro, rh = run_case(37, 5, 12, 48, 10, max_time_chunk=16)
    assert jnp.allclose(o, ro, atol=3e-2, rtol=3e-2), "chunked: output mismatch"
    assert jnp.allclose(h, rh, atol=3e-2, rtol=3e-2), "chunked: hidden mismatch"

    print("KERNEL_OK")
</pallas_src>

<mosaic_0001>
module attributes {stable_mosaic.version = 11 : i64} {
  func.func @rnn_recurrence_kernel(%arg0: i32, %arg1: i32, %arg2: memref<8x8x128xf32, #tpu.memory_space<vmem>>, %arg3: memref<8x128xf32, #tpu.memory_space<vmem>>, %arg4: memref<128x128xf32, #tpu.memory_space<vmem>>, %arg5: memref<8x128xf32, #tpu.memory_space<vmem>>) attributes {dimension_semantics = [#tpu.dimension_semantics<parallel>, #tpu.dimension_semantics<arbitrary>], iteration_bounds = array<i64: 1, 1>, scalar_prefetch = 0 : i64, scratch_operands = 0 : i64, tpu.core_type = #tpu.core_type<tc>, window_params = [{transform_indices = @transform_0, window_bounds = array<i64: 8, 8, 128>}, {transform_indices = @transform_1, window_bounds = array<i64: 8, 128>}, {pipeline_mode = #tpu.pipeline_mode<synchronous>, transform_indices = @transform_2, window_bounds = array<i64: 128, 128>}, {transform_indices = @transform_3, window_bounds = array<i64: 8, 128>}]} {
    %c0_i32 = arith.constant 0 : i32
    %0 = arith.cmpi eq, %arg1, %c0_i32 : i32
    %1 = arith.extui %0 : i1 to i32
    %c0_i32_0 = arith.constant 0 : i32
    %2 = arith.cmpi ne, %1, %c0_i32_0 : i32
    scf.if %2 {
      %c0_44 = arith.constant 0 : index
      %c0_45 = arith.constant 0 : index
      %61 = vector.load %arg3[%c0_44, %c0_45] : memref<8x128xf32, #tpu.memory_space<vmem>>, vector<8x128xf32>
      %c0_46 = arith.constant 0 : index
      %c0_47 = arith.constant 0 : index
      %62 = vector.load %arg5[%c0_46, %c0_47] : memref<8x128xf32, #tpu.memory_space<vmem>>, vector<8x128xf32>
      tpu.vector_store %arg5[%c0_46, %c0_47], %61 {strides = array<i32>} : memref<8x128xf32, #tpu.memory_space<vmem>>, vector<8x128xf32>,
    } else {
    }
    %c0 = arith.constant 0 : index
    %c0_1 = arith.constant 0 : index
    %3 = vector.load %arg5[%c0, %c0_1] : memref<8x128xf32, #tpu.memory_space<vmem>>, vector<8x128xf32>
    %c0_i32_2 = arith.constant 0 : i32
    %4 = arith.index_cast %c0_i32_2 : i32 to index
    %c0_3 = arith.constant 0 : index
    %c0_4 = arith.constant 0 : index
    %5 = vector.load %arg2[%4, %c0_3, %c0_4] : memref<8x8x128xf32, #tpu.memory_space<vmem>>, vector<1x8x128xf32>
    %6 = vector.shape_cast %5 : vector<1x8x128xf32> to vector<8x128xf32>
    %c0_5 = arith.constant 0 : index
    %c0_6 = arith.constant 0 : index
    %7 = vector.load %arg4[%c0_5, %c0_6] : memref<128x128xf32, #tpu.memory_space<vmem>>, vector<128x128xf32>
    %cst = arith.constant dense<0.000000e+00> : vector<8x128xf32>
    %8 = tpu.matmul %3, %7, %cst {dimension_numbers = #tpu.dot_dimension_numbers<[1], [0], [0], [1], [0, 0, 1, 1], [], []>} : vector<8x128xf32>, vector<128x128xf32>, vector<8x128xf32> -> vector<8x128xf32>
    %9 = arith.addf %6, %8 : vector<8x128xf32>
    %10 = math.tanh %9 : vector<8x128xf32>
    %c1_i32 = arith.constant 1 : i32
    %11 = arith.index_cast %c1_i32 : i32 to index
    %c0_7 = arith.constant 0 : index
    %c0_8 = arith.constant 0 : index
    %12 = vector.load %arg2[%11, %c0_7, %c0_8] : memref<8x8x128xf32, #tpu.memory_space<vmem>>, vector<1x8x128xf32>
    %13 = vector.shape_cast %12 : vector<1x8x128xf32> to vector<8x128xf32>
    %c0_9 = arith.constant 0 : index
    %c0_10 = arith.constant 0 : index
    %14 = vector.load %arg4[%c0_9, %c0_10] : memref<128x128xf32, #tpu.memory_space<vmem>>, vector<128x128xf32>
    %cst_11 = arith.constant dense<0.000000e+00> : vector<8x128xf32>
    %15 = tpu.matmul %10, %14, %cst_11 {dimension_numbers = #tpu.dot_dimension_numbers<[1], [0], [0], [1], [0, 0, 1, 1], [], []>} : vector<8x128xf32>, vector<128x128xf32>, vector<8x128xf32> -> vector<8x128xf32>
    %16 = arith.addf %13, %15 : vector<8x128xf32>
    %17 = math.tanh %16 : vector<8x128xf32>
    %c2_i32 = arith.constant 2 : i32
    %18 = arith.index_cast %c2_i32 : i32 to index
    %c0_12 = arith.constant 0 : index
    %c0_13 = arith.constant 0 : index
    %19 = vector.load %arg2[%18, %c0_12, %c0_13] : memref<8x8x128xf32, #tpu.memory_space<vmem>>, vector<1x8x128xf32>
    %20 = vector.shape_cast %19 : vector<1x8x128xf32> to vector<8x128xf32>
    %c0_14 = arith.constant 0 : index
    %c0_15 = arith.constant 0 : index
    %21 = vector.load %arg4[%c0_14, %c0_15] : memref<128x128xf32, #tpu.memory_space<vmem>>, vector<128x128xf32>
    %cst_16 = arith.constant dense<0.000000e+00> : vector<8x128xf32>
    %22 = tpu.matmul %17, %21, %cst_16 {dimension_numbers = #tpu.dot_dimension_numbers<[1], [0], [0], [1], [0, 0, 1, 1], [], []>} : vector<8x128xf32>, vector<128x128xf32>, vector<8x128xf32> -> vector<8x128xf32>
    %23 = arith.addf %20, %22 : vector<8x128xf32>
    %24 = math.tanh %23 : vector<8x128xf32>
    %c3_i32 = arith.constant 3 : i32
    %25 = arith.index_cast %c3_i32 : i32 to index
    %c0_17 = arith.constant 0 : index
    %c0_18 = arith.constant 0 : index
    %26 = vector.load %arg2[%25, %c0_17, %c0_18] : memref<8x8x128xf32, #tpu.memory_space<vmem>>, vector<1x8x128xf32>
    %27 = vector.shape_cast %26 : vector<1x8x128xf32> to vector<8x128xf32>
    %c0_19 = arith.constant 0 : index
    %c0_20 = arith.constant 0 : index
    %28 = vector.load %arg4[%c0_19, %c0_20] : memref<128x128xf32, #tpu.memory_space<vmem>>, vector<128x128xf32>
    %cst_21 = arith.constant dense<0.000000e+00> : vector<8x128xf32>
    %29 = tpu.matmul %24, %28, %cst_21 {dimension_numbers = #tpu.dot_dimension_numbers<[1], [0], [0], [1], [0, 0, 1, 1], [], []>} : vector<8x128xf32>, vector<128x128xf32>, vector<8x128xf32> -> vector<8x128xf32>
    %30 = arith.addf %27, %29 : vector<8x128xf32>
    %31 = math.tanh %30 : vector<8x128xf32>
    %c4_i32 = arith.constant 4 : i32
    %32 = arith.index_cast %c4_i32 : i32 to index
    %c0_22 = arith.constant 0 : index
    %c0_23 = arith.constant 0 : index
    %33 = vector.load %arg2[%32, %c0_22, %c0_23] : memref<8x8x128xf32, #tpu.memory_space<vmem>>, vector<1x8x128xf32>
    %34 = vector.shape_cast %33 : vector<1x8x128xf32> to vector<8x128xf32>
    %c0_24 = arith.constant 0 : index
    %c0_25 = arith.constant 0 : index
    %35 = vector.load %arg4[%c0_24, %c0_25] : memref<128x128xf32, #tpu.memory_space<vmem>>, vector<128x128xf32>
    %cst_26 = arith.constant dense<0.000000e+00> : vector<8x128xf32>
    %36 = tpu.matmul %31, %35, %cst_26 {dimension_numbers = #tpu.dot_dimension_numbers<[1], [0], [0], [1], [0, 0, 1, 1], [], []>} : vector<8x128xf32>, vector<128x128xf32>, vector<8x128xf32> -> vector<8x128xf32>
    %37 = arith.addf %34, %36 : vector<8x128xf32>
    %38 = math.tanh %37 : vector<8x128xf32>
    %c5_i32 = arith.constant 5 : i32
    %39 = arith.index_cast %c5_i32 : i32 to index
    %c0_27 = arith.constant 0 : index
    %c0_28 = arith.constant 0 : index
    %40 = vector.load %arg2[%39, %c0_27, %c0_28] : memref<8x8x128xf32, #tpu.memory_space<vmem>>, vector<1x8x128xf32>
    %41 = vector.shape_cast %40 : vector<1x8x128xf32> to vector<8x128xf32>
    %c0_29 = arith.constant 0 : index
    %c0_30 = arith.constant 0 : index
    %42 = vector.load %arg4[%c0_29, %c0_30] : memref<128x128xf32, #tpu.memory_space<vmem>>, vector<128x128xf32>
    %cst_31 = arith.constant dense<0.000000e+00> : vector<8x128xf32>
    %43 = tpu.matmul %38, %42, %cst_31 {dimension_numbers = #tpu.dot_dimension_numbers<[1], [0], [0], [1], [0, 0, 1, 1], [], []>} : vector<8x128xf32>, vector<128x128xf32>, vector<8x128xf32> -> vector<8x128xf32>
    %44 = arith.addf %41, %43 : vector<8x128xf32>
    %45 = math.tanh %44 : vector<8x128xf32>
    %c6_i32 = arith.constant 6 : i32
    %46 = arith.index_cast %c6_i32 : i32 to index
    %c0_32 = arith.constant 0 : index
    %c0_33 = arith.constant 0 : index
    %47 = vector.load %arg2[%46, %c0_32, %c0_33] : memref<8x8x128xf32, #tpu.memory_space<vmem>>, vector<1x8x128xf32>
    %48 = vector.shape_cast %47 : vector<1x8x128xf32> to vector<8x128xf32>
    %c0_34 = arith.constant 0 : index
    %c0_35 = arith.constant 0 : index
    %49 = vector.load %arg4[%c0_34, %c0_35] : memref<128x128xf32, #tpu.memory_space<vmem>>, vector<128x128xf32>
    %cst_36 = arith.constant dense<0.000000e+00> : vector<8x128xf32>
    %50 = tpu.matmul %45, %49, %cst_36 {dimension_numbers = #tpu.dot_dimension_numbers<[1], [0], [0], [1], [0, 0, 1, 1], [], []>} : vector<8x128xf32>, vector<128x128xf32>, vector<8x128xf32> -> vector<8x128xf32>
    %51 = arith.addf %48, %50 : vector<8x128xf32>
    %52 = math.tanh %51 : vector<8x128xf32>
    %c7_i32 = arith.constant 7 : i32
    %53 = arith.index_cast %c7_i32 : i32 to index
    %c0_37 = arith.constant 0 : index
    %c0_38 = arith.constant 0 : index
    %54 = vector.load %arg2[%53, %c0_37, %c0_38] : memref<8x8x128xf32, #tpu.memory_space<vmem>>, vector<1x8x128xf32>
    %55 = vector.shape_cast %54 : vector<1x8x128xf32> to vector<8x128xf32>
    %c0_39 = arith.constant 0 : index
    %c0_40 = arith.constant 0 : index
    %56 = vector.load %arg4[%c0_39, %c0_40] : memref<128x128xf32, #tpu.memory_space<vmem>>, vector<128x128xf32>
    %cst_41 = arith.constant dense<0.000000e+00> : vector<8x128xf32>
    %57 = tpu.matmul %52, %56, %cst_41 {dimension_numbers = #tpu.dot_dimension_numbers<[1], [0], [0], [1], [0, 0, 1, 1], [], []>} : vector<8x128xf32>, vector<128x128xf32>, vector<8x128xf32> -> vector<8x128xf32>
    %58 = arith.addf %55, %57 : vector<8x128xf32>
    %59 = math.tanh %58 : vector<8x128xf32>
    %c8_i32 = arith.constant 8 : i32
    %c0_42 = arith.constant 0 : index
    %c0_43 = arith.constant 0 : index
    %60 = vector.load %arg5[%c0_42, %c0_43] : memref<8x128xf32, #tpu.memory_space<vmem>>, vector<8x128xf32>
    tpu.vector_store %arg5[%c0_42, %c0_43], %59 {strides = array<i32>} : memref<8x128xf32, #tpu.memory_space<vmem>>, vector<8x128xf32>,
    return
  }
  func.func @transform_0(%arg0: i32, %arg1: i32) -> (i32, i32, i32) {
    %c0_i32 = arith.constant 0 : i32
    %c0_i32_0 = arith.constant 0 : i32
    return %arg1, %arg0, %c0_i32 : i32, i32, i32
  }
  func.func @transform_1(%arg0: i32, %arg1: i32) -> (i32, i32) {
    %c0_i32 = arith.constant 0 : i32
    %c0_i32_0 = arith.constant 0 : i32
    return %arg0, %c0_i32 : i32, i32
  }
  func.func @transform_2(%arg0: i32, %arg1: i32) -> (i32, i32) {
    %c0_i32 = arith.constant 0 : i32
    %c0_i32_0 = arith.constant 0 : i32
    %c0_i32_1 = arith.constant 0 : i32
    return %c0_i32, %c0_i32_0 : i32, i32
  }
  func.func @transform_3(%arg0: i32, %arg1: i32) -> (i32, i32) {
    %c0_i32 = arith.constant 0 : i32
    %c0_i32_0 = arith.constant 0 : i32
    return %arg0, %c0_i32 : i32, i32
  }
}

</mosaic_0001>

<llo_original>
// kernel: tpu_custom_call.1
$region0: #{tpu_custom_call.1}
  #allocation0 [shape = 'u32[]', space=smem, size = 0x4, offset = 0x4, fixed_abs, tag = 'smem constant byte address 0x4 - core index']
  #allocation1 [shape = 'u32[144,128]{1,0:T(1,128)}', space=vmem, size = 0x12000, scoped, tag = 'internal scratch']
  %s0 = inlined_call_operand.hbm [shape: f32[8,8,128], index: 0, kind: input, shape index: {}]
  %s1 = inlined_call_operand.hbm [shape: f32[8,128], index: 1, kind: input, shape index: {}]
  %s2 = inlined_call_operand.hbm [shape: f32[128,128], index: 2, kind: input, shape index: {}]
  %s3 = inlined_call_operand.hbm [shape: f32[8,128], index: 3, kind: output, shape index: {}]
  %s4 = sld [smem:[#allocation0]]
  $region38: #{tpu_custom_call.1} parent=0
    _
  %s6 = ssub.s32 1, %s4
  %s7 = scalar_select 0, %s6, %s4
  $region1: #{tpu_custom_call.1} parent=0
    #allocation2 [shape = 'u8[32768]{0}', space=vmem, size = 0x8000, scoped, tag = 'input window, operand 0, single buffered']
    #allocation3 [shape = 's32[1]{0}', space=sflag, size = 0x4, scoped, tag = 'scoped memory for tpu_custom_call.1']
    #allocation4 [shape = 's32[1]{0}', space=sflag, size = 0x4, scoped, tag = 'scoped memory for tpu_custom_call.1']
    #allocation5 [shape = 'u8[4096]{0}', space=vmem, size = 0x1000, scoped, tag = 'input window, operand 1, single buffered']
    #allocation6 [shape = 's32[1]{0}', space=sflag, size = 0x4, scoped, tag = 'scoped memory for tpu_custom_call.1']
    #allocation7 [shape = 'u8[65536]{0}', space=vmem, size = 0x10000, scoped, tag = 'input window, operand 2, single buffered']
    #allocation8 [shape = 'u8[4096]{0}', space=vmem, size = 0x1000, scoped, tag = 'output window, operand 0, single buffered']
    %8 = vsyncpa [#allocation3], 0
    %9 = vsyncpa [#allocation6], 0
    %10 = vsyncpa [#allocation4], 0
    // Predicated region
    $region2: #{tpu_custom_call.1} parent=1 // pred_check
      _
    $region3: #{tpu_custom_call.1} parent=1 // pred_check_branch
      %12 = sbr.rel (0) target = $region5
    $region4: #{tpu_custom_call.1} parent=1 // pred_region
      %s14 = ssub.s32 1024, 1024
      %15 = vsyncadd [#allocation3], %s14
      %s16 = sshll.u32 [#allocation2], 4
      %s17 = int_to_ptr.vmem [resolvable:$true] %s16
      %22 = dma.hbm_to_vmem [thread:$0]  %s0, 1024, %s17, [#allocation3], 128, 128, 8
    $region5: #{tpu_custom_call.1} parent=1 // pred_fallthru
      _
    // Predicated region
    $region6: #{tpu_custom_call.1} parent=1 // pred_check
      _
    $region7: #{tpu_custom_call.1} parent=1 // pred_check_branch
      %24 = sbr.rel (0) target = $region9
    $region8: #{tpu_custom_call.1} parent=1 // pred_region
      %s26 = ssub.s32 128, 128
      %27 = vsyncadd [#allocation6], %s26
      %s29 = sshll.u32 [#allocation5], 4
      %s30 = int_to_ptr.vmem [resolvable:$true] %s29
      %32 = dma.hbm_to_vmem [thread:$0]  %s1, 128, %s30, [#allocation6]
    $region9: #{tpu_custom_call.1} parent=1 // pred_fallthru
      _
    // Predicated region
    $region10: #{tpu_custom_call.1} parent=1 // pred_check
      _
    $region11: #{tpu_custom_call.1} parent=1 // pred_check_branch
      %34 = sbr.rel (0) target = $region13
    $region12: #{tpu_custom_call.1} parent=1 // pred_region
      %s36 = ssub.s32 2048, 2048
      %37 = vsyncadd [#allocation6], %s36
      %s38 = sshll.u32 [#allocation7], 4
      %s39 = int_to_ptr.vmem [resolvable:$true] %s38
      %44 = dma.hbm_to_vmem [thread:$0]  %s2, 2048, %s39, [#allocation6], 128, 128, 8
    $region13: #{tpu_custom_call.1} parent=1 // pred_fallthru
      _
    // Predicated region
    $region14: #{tpu_custom_call.1} parent=1 // pred_check
      _
    $region15: #{tpu_custom_call.1} parent=1 // pred_check_branch
      %46 = sbr.rel (0) target = $region17
    $region16: #{tpu_custom_call.1} parent=1 // pred_region
      %47 = dma.done [#allocation3], 1024
    $region17: #{tpu_custom_call.1} parent=1 // pred_fallthru
      _
    // Predicated region
    $region18: #{tpu_custom_call.1} parent=1 // pred_check
      _
    $region19: #{tpu_custom_call.1} parent=1 // pred_check_branch
      %49 = sbr.rel (0) target = $region21
    $region20: #{tpu_custom_call.1} parent=1 // pred_region
      %50 = dma.done [#allocation6], 128
    $region21: #{tpu_custom_call.1} parent=1 // pred_fallthru
      _
    // Predicated region
    $region22: #{tpu_custom_call.1} parent=1 // pred_check
      _
    $region23: #{tpu_custom_call.1} parent=1 // pred_check_branch
      %52 = sbr.rel (0) target = $region25
    $region24: #{tpu_custom_call.1} parent=1 // pred_region
      %53 = dma.done [#allocation6], 2048
    $region25: #{tpu_custom_call.1} parent=1 // pred_fallthru
      _
    %p54 = scmp.eq.s32.totalorder 0, 0
    // Predicated region
    $region26: #{tpu_custom_call.1} parent=1 // pred_check
      %p55 = pneg %p54
    $region27: #{tpu_custom_call.1} parent=1 // pred_check_branch
      %57 = sbr.rel (%p55) target = $region29
    $region28: #{tpu_custom_call.1} parent=1 // pred_region
      %v58 = vld [vmem:[#allocation5] sm:$0xff]
      %59 = vst [vmem:[#allocation8] sm:$0xff] %v58
    $region29: #{tpu_custom_call.1} parent=1 // pred_fallthru
      _
    %v60 = vld [vmem:[#allocation8] sm:$0xff]
    %v61 = vld [vmem:[#allocation2] sm:$0xff]
    %v62 = vld [vmem:[#allocation7] sm:$0xff]
    %v63 = vld [vmem:[#allocation7 + $0x8] sm:$0xff]
    %v64 = vld [vmem:[#allocation7 + $0x10] sm:$0xff]
    %v65 = vld [vmem:[#allocation7 + $0x18] sm:$0xff]
    %v66 = vld [vmem:[#allocation7 + $0x20] sm:$0xff]
    %v67 = vld [vmem:[#allocation7 + $0x28] sm:$0xff]
    %v68 = vld [vmem:[#allocation7 + $0x30] sm:$0xff]
    %v69 = vld [vmem:[#allocation7 + $0x38] sm:$0xff]
    %v70 = vld [vmem:[#allocation7 + $0x40] sm:$0xff]
    %v71 = vld [vmem:[#allocation7 + $0x48] sm:$0xff]
    %v72 = vld [vmem:[#allocation7 + $0x50] sm:$0xff]
    %v73 = vld [vmem:[#allocation7 + $0x58] sm:$0xff]
    %v74 = vld [vmem:[#allocation7 + $0x60] sm:$0xff]
    %v75 = vld [vmem:[#allocation7 + $0x68] sm:$0xff]
    %v76 = vld [vmem:[#allocation7 + $0x70] sm:$0xff]
    %v77 = vld [vmem:[#allocation7 + $0x78] sm:$0xff]
    %78 = vmatprep.subr.mxu0 0.0
    %79 = vmatpush1.msra.mxu0 %v77
    %80 = vmatprep.subr.mxu0 0.0
    %81 = vmatpush1.msra.mxu0 %v76
    %82 = vmatprep.subr.mxu0 0.0
    %83 = vmatpush1.msra.mxu0 %v75
    %84 = vmatprep.subr.mxu0 0.0
    %85 = vmatpush1.msra.mxu0 %v74
    %86 = vmatprep.subr.mxu0 0.0
    %87 = vmatpush1.msra.mxu0 %v73
    %88 = vmatprep.subr.mxu0 0.0
    %89 = vmatpush1.msra.mxu0 %v72
    %90 = vmatprep.subr.mxu0 0.0
    %91 = vmatpush1.msra.mxu0 %v71
    %92 = vmatprep.subr.mxu0 0.0
    %93 = vmatpush1.msra.mxu0 %v70
    %94 = vmatprep.subr.mxu0 0.0
    %95 = vmatpush1.msra.mxu0 %v69
    %96 = vmatprep.subr.mxu0 0.0
    %97 = vmatpush1.msra.mxu0 %v68
    %98 = vmatprep.subr.mxu0 0.0
    %99 = vmatpush1.msra.mxu0 %v67
    %100 = vmatprep.subr.mxu0 0.0
    %101 = vmatpush1.msra.mxu0 %v66
    %102 = vmatprep.subr.mxu0 0.0
    %103 = vmatpush1.msra.mxu0 %v65
    %104 = vmatprep.subr.mxu0 0.0
    %105 = vmatpush1.msra.mxu0 %v64
    %106 = vmatprep.subr.mxu0 0.0
    %107 = vmatpush1.msra.mxu0 %v63
    %108 = vmatprep.subr.mxu0 0.0
    %109 = vmatpush1.msra.mxu0 %v62
    %110 = vmatprep.subr.mxu0 0.0
    %111 = vmatpush2.msra.mxu0 0.0
    %112 = vmatprep.subr.mxu0 0.0
    %113 = vmatpush2.msra.mxu0 0.0
    %114 = vmatprep.subr.mxu0 0.0
    %115 = vmatpush2.msra.mxu0 0.0
    %116 = vmatprep.subr.mxu0 0.0
    %117 = vmatpush2.msra.mxu0 0.0
    %118 = vmatprep.subr.mxu0 0.0
    %119 = vmatpush2.msra.mxu0 0.0
    %120 = vmatprep.subr.mxu0 0.0
    %121 = vmatpush2.msra.mxu0 0.0
    %122 = vmatprep.subr.mxu0 0.0
    %123 = vmatpush2.msra.mxu0 0.0
    %124 = vmatprep.subr.mxu0 0.0
    %125 = vmatpush2.msra.mxu0 0.0
    %126 = vmatprep.subr.mxu0 0.0
    %127 = vmatpush2.msra.mxu0 0.0
    %128 = vmatprep.subr.mxu0 0.0
    %129 = vmatpush2.msra.mxu0 0.0
    %130 = vmatprep.subr.mxu0 0.0
    %131 = vmatpush2.msra.mxu0 0.0
    %132 = vmatprep.subr.mxu0 0.0
    %133 = vmatpush2.msra.mxu0 0.0
    %134 = vmatprep.subr.mxu0 0.0
    %135 = vmatpush2.msra.mxu0 0.0
    %136 = vmatprep.subr.mxu0 0.0
    %137 = vmatpush2.msra.mxu0 0.0
    %138 = vmatprep.subr.mxu0 0.0
    %139 = vmatpush2.msra.mxu0 0.0
    %140 = vmatprep.subr.mxu0 0.0
    %141 = vmatpush2.msra.mxu0 0.0
    %142 = vmatprep.mubr.f32.mxu0 0.0
    %143 = vmatmul.mubr.f32.gmra.mxu0 %v60
    %v144 = vpop.f32.mrf.mxu0
    %v145 = vadd.f32 0.0, %v144
    %v146 = vpop.f32.mrf.mxu0
    %147 = vdwg.mxu0
    %v148 = vadd.f32 %v61, %v145
    %v149 = vtanh.pop %v148
    %s150 = scalar_lea.vmem [#allocation2], 8
    %v151 = vld [vmem:[%s150] sm:$0xff]
    %152 = vmatprep.subr.mxu0 0.0
    %153 = vmatpush1.msra.mxu0 %v77
    %154 = vmatprep.subr.mxu0 0.0
    %155 = vmatpush1.msra.mxu0 %v76
    %156 = vmatprep.subr.mxu0 0.0
    %157 = vmatpush1.msra.mxu0 %v75
    %158 = vmatprep.subr.mxu0 0.0
    %159 = vmatpush1.msra.mxu0 %v74
    %160 = vmatprep.subr.mxu0 0.0
    %161 = vmatpush1.msra.mxu0 %v73
    %162 = vmatprep.subr.mxu0 0.0
    %163 = vmatpush1.msra.mxu0 %v72
    %164 = vmatprep.subr.mxu0 0.0
    %165 = vmatpush1.msra.mxu0 %v71
    %166 = vmatprep.subr.mxu0 0.0
    %167 = vmatpush1.msra.mxu0 %v70
    %168 = vmatprep.subr.mxu0 0.0
    %169 = vmatpush1.msra.mxu0 %v69
    %170 = vmatprep.subr.mxu0 0.0
    %171 = vmatpush1.msra.mxu0 %v68
    %172 = vmatprep.subr.mxu0 0.0
    %173 = vmatpush1.msra.mxu0 %v67
    %174 = vmatprep.subr.mxu0 0.0
    %175 = vmatpush1.msra.mxu0 %v66
    %176 = vmatprep.subr.mxu0 0.0
    %177 = vmatpush1.msra.mxu0 %v65
    %178 = vmatprep.subr.mxu0 0.0
    %179 = vmatpush1.msra.mxu0 %v64
    %180 = vmatprep.subr.mxu0 0.0
    %181 = vmatpush1.msra.mxu0 %v63
    %182 = vmatprep.subr.mxu0 0.0
    %183 = vmatpush1.msra.mxu0 %v62
    %184 = vmatprep.subr.mxu0 0.0
    %185 = vmatpush2.msra.mxu0 0.0
    %186 = vmatprep.subr.mxu0 0.0
    %187 = vmatpush2.msra.mxu0 0.0
    %188 = vmatprep.subr.mxu0 0.0
    %189 = vmatpush2.msra.mxu0 0.0
    %190 = vmatprep.subr.mxu0 0.0
    %191 = vmatpush2.msra.mxu0 0.0
    %192 = vmatprep.subr.mxu0 0.0
    %193 = vmatpush2.msra.mxu0 0.0
    %194 = vmatprep.subr.mxu0 0.0
    %195 = vmatpush2.msra.mxu0 0.0
    %196 = vmatprep.subr.mxu0 0.0
    %197 = vmatpush2.msra.mxu0 0.0
    %198 = vmatprep.subr.mxu0 0.0
    %199 = vmatpush2.msra.mxu0 0.0
    %200 = vmatprep.subr.mxu0 0.0
    %201 = vmatpush2.msra.mxu0 0.0
    %202 = vmatprep.subr.mxu0 0.0
    %203 = vmatpush2.msra.mxu0 0.0
    %204 = vmatprep.subr.mxu0 0.0
    %205 = vmatpush2.msra.mxu0 0.0
    %206 = vmatprep.subr.mxu0 0.0
    %207 = vmatpush2.msra.mxu0 0.0
    %208 = vmatprep.subr.mxu0 0.0
    %209 = vmatpush2.msra.mxu0 0.0
    %210 = vmatprep.subr.mxu0 0.0
    %211 = vmatpush2.msra.mxu0 0.0
    %212 = vmatprep.subr.mxu0 0.0
    %213 = vmatpush2.msra.mxu0 0.0
    %214 = vmatprep.subr.mxu0 0.0
    %215 = vmatpush2.msra.mxu0 0.0
    %216 = vmatprep.mubr.f32.mxu0 0.0
    %217 = vmatmul.mubr.f32.gmra.mxu0 %v149
    %v218 = vpop.f32.mrf.mxu0
    %v219 = vadd.f32 0.0, %v218
    %v220 = vpop.f32.mrf.mxu0
    %221 = vdwg.mxu0
    %v222 = vadd.f32 %v151, %v219
    %v223 = vtanh.pop %v222
    %s224 = scalar_lea.vmem [#allocation2], 16
    %v225 = vld [vmem:[%s224] sm:$0xff]
    %226 = vmatprep.subr.mxu0 0.0
    %227 = vmatpush1.msra.mxu0 %v77
    %228 = vmatprep.subr.mxu0 0.0
    %229 = vmatpush1.msra.mxu0 %v76
    %230 = vmatprep.subr.mxu0 0.0
    %231 = vmatpush1.msra.mxu0 %v75
    %232 = vmatprep.subr.mxu0 0.0
    %233 = vmatpush1.msra.mxu0 %v74
    %234 = vmatprep.subr.mxu0 0.0
    %235 = vmatpush1.msra.mxu0 %v73
    %236 = vmatprep.subr.mxu0 0.0
    %237 = vmatpush1.msra.mxu0 %v72
    %238 = vmatprep.subr.mxu0 0.0
    %239 = vmatpush1.msra.mxu0 %v71
    %240 = vmatprep.subr.mxu0 0.0
    %241 = vmatpush1.msra.mxu0 %v70
    %242 = vmatprep.subr.mxu0 0.0
    %243 = vmatpush1.msra.mxu0 %v69
    %244 = vmatprep.subr.mxu0 0.0
    %245 = vmatpush1.msra.mxu0 %v68
    %246 = vmatprep.subr.mxu0 0.0
    %247 = vmatpush1.msra.mxu0 %v67
    %248 = vmatprep.subr.mxu0 0.0
    %249 = vmatpush1.msra.mxu0 %v66
    %250 = vmatprep.subr.mxu0 0.0
    %251 = vmatpush1.msra.mxu0 %v65
    %252 = vmatprep.subr.mxu0 0.0
    %253 = vmatpush1.msra.mxu0 %v64
    %254 = vmatprep.subr.mxu0 0.0
    %255 = vmatpush1.msra.mxu0 %v63
    %256 = vmatprep.subr.mxu0 0.0
    %257 = vmatpush1.msra.mxu0 %v62
    %258 = vmatprep.subr.mxu0 0.0
    %259 = vmatpush2.msra.mxu0 0.0
    %260 = vmatprep.subr.mxu0 0.0
    %261 = vmatpush2.msra.mxu0 0.0
    %262 = vmatprep.subr.mxu0 0.0
    %263 = vmatpush2.msra.mxu0 0.0
    %264 = vmatprep.subr.mxu0 0.0
    %265 = vmatpush2.msra.mxu0 0.0
    %266 = vmatprep.subr.mxu0 0.0
    %267 = vmatpush2.msra.mxu0 0.0
    %268 = vmatprep.subr.mxu0 0.0
    %269 = vmatpush2.msra.mxu0 0.0
    %270 = vmatprep.subr.mxu0 0.0
    %271 = vmatpush2.msra.mxu0 0.0
    %272 = vmatprep.subr.mxu0 0.0
    %273 = vmatpush2.msra.mxu0 0.0
    %274 = vmatprep.subr.mxu0 0.0
    %275 = vmatpush2.msra.mxu0 0.0
    %276 = vmatprep.subr.mxu0 0.0
    %277 = vmatpush2.msra.mxu0 0.0
    %278 = vmatprep.subr.mxu0 0.0
    %279 = vmatpush2.msra.mxu0 0.0
    %280 = vmatprep.subr.mxu0 0.0
    %281 = vmatpush2.msra.mxu0 0.0
    %282 = vmatprep.subr.mxu0 0.0
    %283 = vmatpush2.msra.mxu0 0.0
    %284 = vmatprep.subr.mxu0 0.0
    %285 = vmatpush2.msra.mxu0 0.0
    %286 = vmatprep.subr.mxu0 0.0
    %287 = vmatpush2.msra.mxu0 0.0
    %288 = vmatprep.subr.mxu0 0.0
    %289 = vmatpush2.msra.mxu0 0.0
    %290 = vmatprep.mubr.f32.mxu0 0.0
    %291 = vmatmul.mubr.f32.gmra.mxu0 %v223
    %v292 = vpop.f32.mrf.mxu0
    %v293 = vadd.f32 0.0, %v292
    %v294 = vpop.f32.mrf.mxu0
    %295 = vdwg.mxu0
    %v296 = vadd.f32 %v225, %v293
    %v297 = vtanh.pop %v296
    %s298 = scalar_lea.vmem [#allocation2], 24
    %v299 = vld [vmem:[%s298] sm:$0xff]
    %300 = vmatprep.subr.mxu0 0.0
    %301 = vmatpush1.msra.mxu0 %v77
    %302 = vmatprep.subr.mxu0 0.0
    %303 = vmatpush1.msra.mxu0 %v76
    %304 = vmatprep.subr.mxu0 0.0
    %305 = vmatpush1.msra.mxu0 %v75
    %306 = vmatprep.subr.mxu0 0.0
    %307 = vmatpush1.msra.mxu0 %v74
    %308 = vmatprep.subr.mxu0 0.0
    %309 = vmatpush1.msra.mxu0 %v73
    %310 = vmatprep.subr.mxu0 0.0
    %311 = vmatpush1.msra.mxu0 %v72
    %312 = vmatprep.subr.mxu0 0.0
    %313 = vmatpush1.msra.mxu0 %v71
    %314 = vmatprep.subr.mxu0 0.0
    %315 = vmatpush1.msra.mxu0 %v70
    %316 = vmatprep.subr.mxu0 0.0
    %317 = vmatpush1.msra.mxu0 %v69
    %318 = vmatprep.subr.mxu0 0.0
    %319 = vmatpush1.msra.mxu0 %v68
    %320 = vmatprep.subr.mxu0 0.0
    %321 = vmatpush1.msra.mxu0 %v67
    %322 = vmatprep.subr.mxu0 0.0
    %323 = vmatpush1.msra.mxu0 %v66
    %324 = vmatprep.subr.mxu0 0.0
    %325 = vmatpush1.msra.mxu0 %v65
    %326 = vmatprep.subr.mxu0 0.0
    %327 = vmatpush1.msra.mxu0 %v64
    %328 = vmatprep.subr.mxu0 0.0
    %329 = vmatpush1.msra.mxu0 %v63
    %330 = vmatprep.subr.mxu0 0.0
    %331 = vmatpush1.msra.mxu0 %v62
    %332 = vmatprep.subr.mxu0 0.0
    %333 = vmatpush2.msra.mxu0 0.0
    %334 = vmatprep.subr.mxu0 0.0
    %335 = vmatpush2.msra.mxu0 0.0
    %336 = vmatprep.subr.mxu0 0.0
    %337 = vmatpush2.msra.mxu0 0.0
    %338 = vmatprep.subr.mxu0 0.0
    %339 = vmatpush2.msra.mxu0 0.0
    %340 = vmatprep.subr.mxu0 0.0
    %341 = vmatpush2.msra.mxu0 0.0
    %342 = vmatprep.subr.mxu0 0.0
    %343 = vmatpush2.msra.mxu0 0.0
    %344 = vmatprep.subr.mxu0 0.0
    %345 = vmatpush2.msra.mxu0 0.0
    %346 = vmatprep.subr.mxu0 0.0
    %347 = vmatpush2.msra.mxu0 0.0
    %348 = vmatprep.subr.mxu0 0.0
    %349 = vmatpush2.msra.mxu0 0.0
    %350 = vmatprep.subr.mxu0 0.0
    %351 = vmatpush2.msra.mxu0 0.0
    %352 = vmatprep.subr.mxu0 0.0
    %353 = vmatpush2.msra.mxu0 0.0
    %354 = vmatprep.subr.mxu0 0.0
    %355 = vmatpush2.msra.mxu0 0.0
    %356 = vmatprep.subr.mxu0 0.0
    %357 = vmatpush2.msra.mxu0 0.0
    %358 = vmatprep.subr.mxu0 0.0
    %359 = vmatpush2.msra.mxu0 0.0
    %360 = vmatprep.subr.mxu0 0.0
    %361 = vmatpush2.msra.mxu0 0.0
    %362 = vmatprep.subr.mxu0 0.0
    %363 = vmatpush2.msra.mxu0 0.0
    %364 = vmatprep.mubr.f32.mxu0 0.0
    %365 = vmatmul.mubr.f32.gmra.mxu0 %v297
    %v366 = vpop.f32.mrf.mxu0
    %v367 = vadd.f32 0.0, %v366
    %v368 = vpop.f32.mrf.mxu0
    %369 = vdwg.mxu0
    %v370 = vadd.f32 %v299, %v367
    %v371 = vtanh.pop %v370
    %s372 = scalar_lea.vmem [#allocation2], 32
    %v373 = vld [vmem:[%s372] sm:$0xff]
    %374 = vmatprep.subr.mxu0 0.0
    %375 = vmatpush1.msra.mxu0 %v77
    %376 = vmatprep.subr.mxu0 0.0
    %377 = vmatpush1.msra.mxu0 %v76
    %378 = vmatprep.subr.mxu0 0.0
    %379 = vmatpush1.msra.mxu0 %v75
    %380 = vmatprep.subr.mxu0 0.0
    %381 = vmatpush1.msra.mxu0 %v74
    %382 = vmatprep.subr.mxu0 0.0
    %383 = vmatpush1.msra.mxu0 %v73
    %384 = vmatprep.subr.mxu0 0.0
    %385 = vmatpush1.msra.mxu0 %v72
    %386 = vmatprep.subr.mxu0 0.0
    %387 = vmatpush1.msra.mxu0 %v71
    %388 = vmatprep.subr.mxu0 0.0
    %389 = vmatpush1.msra.mxu0 %v70
    %390 = vmatprep.subr.mxu0 0.0
    %391 = vmatpush1.msra.mxu0 %v69
    %392 = vmatprep.subr.mxu0 0.0
    %393 = vmatpush1.msra.mxu0 %v68
    %394 = vmatprep.subr.mxu0 0.0
    %395 = vmatpush1.msra.mxu0 %v67
    %396 = vmatprep.subr.mxu0 0.0
    %397 = vmatpush1.msra.mxu0 %v66
    %398 = vmatprep.subr.mxu0 0.0
    %399 = vmatpush1.msra.mxu0 %v65
    %400 = vmatprep.subr.mxu0 0.0
    %401 = vmatpush1.msra.mxu0 %v64
    %402 = vmatprep.subr.mxu0 0.0
    %403 = vmatpush1.msra.mxu0 %v63
    %404 = vmatprep.subr.mxu0 0.0
    %405 = vmatpush1.msra.mxu0 %v62
    %406 = vmatprep.subr.mxu0 0.0
    %407 = vmatpush2.msra.mxu0 0.0
    %408 = vmatprep.subr.mxu0 0.0
    %409 = vmatpush2.msra.mxu0 0.0
    %410 = vmatprep.subr.mxu0 0.0
    %411 = vmatpush2.msra.mxu0 0.0
    %412 = vmatprep.subr.mxu0 0.0
    %413 = vmatpush2.msra.mxu0 0.0
    %414 = vmatprep.subr.mxu0 0.0
    %415 = vmatpush2.msra.mxu0 0.0
    %416 = vmatprep.subr.mxu0 0.0
    %417 = vmatpush2.msra.mxu0 0.0
    %418 = vmatprep.subr.mxu0 0.0
    %419 = vmatpush2.msra.mxu0 0.0
    %420 = vmatprep.subr.mxu0 0.0
    %421 = vmatpush2.msra.mxu0 0.0
    %422 = vmatprep.subr.mxu0 0.0
    %423 = vmatpush2.msra.mxu0 0.0
    %424 = vmatprep.subr.mxu0 0.0
    %425 = vmatpush2.msra.mxu0 0.0
    %426 = vmatprep.subr.mxu0 0.0
    %427 = vmatpush2.msra.mxu0 0.0
    %428 = vmatprep.subr.mxu0 0.0
    %429 = vmatpush2.msra.mxu0 0.0
    %430 = vmatprep.subr.mxu0 0.0
    %431 = vmatpush2.msra.mxu0 0.0
    %432 = vmatprep.subr.mxu0 0.0
    %433 = vmatpush2.msra.mxu0 0.0
    %434 = vmatprep.subr.mxu0 0.0
    %435 = vmatpush2.msra.mxu0 0.0
    %436 = vmatprep.subr.mxu0 0.0
    %437 = vmatpush2.msra.mxu0 0.0
    %438 = vmatprep.mubr.f32.mxu0 0.0
    %439 = vmatmul.mubr.f32.gmra.mxu0 %v371
    %v440 = vpop.f32.mrf.mxu0
    %v441 = vadd.f32 0.0, %v440
    %v442 = vpop.f32.mrf.mxu0
    %443 = vdwg.mxu0
    %v444 = vadd.f32 %v373, %v441
    %v445 = vtanh.pop %v444
    %s446 = scalar_lea.vmem [#allocation2], 40
    %v447 = vld [vmem:[%s446] sm:$0xff]
    %448 = vmatprep.subr.mxu0 0.0
    %449 = vmatpush1.msra.mxu0 %v77
    %450 = vmatprep.subr.mxu0 0.0
    %451 = vmatpush1.msra.mxu0 %v76
    %452 = vmatprep.subr.mxu0 0.0
    %453 = vmatpush1.msra.mxu0 %v75
    %454 = vmatprep.subr.mxu0 0.0
    %455 = vmatpush1.msra.mxu0 %v74
    %456 = vmatprep.subr.mxu0 0.0
    %457 = vmatpush1.msra.mxu0 %v73
    %458 = vmatprep.subr.mxu0 0.0
    %459 = vmatpush1.msra.mxu0 %v72
    %460 = vmatprep.subr.mxu0 0.0
    %461 = vmatpush1.msra.mxu0 %v71
    %462 = vmatprep.subr.mxu0 0.0
    %463 = vmatpush1.msra.mxu0 %v70
    %464 = vmatprep.subr.mxu0 0.0
    %465 = vmatpush1.msra.mxu0 %v69
    %466 = vmatprep.subr.mxu0 0.0
    %467 = vmatpush1.msra.mxu0 %v68
    %468 = vmatprep.subr.mxu0 0.0
    %469 = vmatpush1.msra.mxu0 %v67
    %470 = vmatprep.subr.mxu0 0.0
    %471 = vmatpush1.msra.mxu0 %v66
    %472 = vmatprep.subr.mxu0 0.0
    %473 = vmatpush1.msra.mxu0 %v65
    %474 = vmatprep.subr.mxu0 0.0
    %475 = vmatpush1.msra.mxu0 %v64
    %476 = vmatprep.subr.mxu0 0.0
    %477 = vmatpush1.msra.mxu0 %v63
    %478 = vmatprep.subr.mxu0 0.0
    %479 = vmatpush1.msra.mxu0 %v62
    %480 = vmatprep.subr.mxu0 0.0
    %481 = vmatpush2.msra.mxu0 0.0
    %482 = vmatprep.subr.mxu0 0.0
    %483 = vmatpush2.msra.mxu0 0.0
    %484 = vmatprep.subr.mxu0 0.0
    %485 = vmatpush2.msra.mxu0 0.0
    %486 = vmatprep.subr.mxu0 0.0
    %487 = vmatpush2.msra.mxu0 0.0
    %488 = vmatprep.subr.mxu0 0.0
    %489 = vmatpush2.msra.mxu0 0.0
    %490 = vmatprep.subr.mxu0 0.0
    %491 = vmatpush2.msra.mxu0 0.0
    %492 = vmatprep.subr.mxu0 0.0
    %493 = vmatpush2.msra.mxu0 0.0
    %494 = vmatprep.subr.mxu0 0.0
    %495 = vmatpush2.msra.mxu0 0.0
    %496 = vmatprep.subr.mxu0 0.0
    %497 = vmatpush2.msra.mxu0 0.0
    %498 = vmatprep.subr.mxu0 0.0
    %499 = vmatpush2.msra.mxu0 0.0
    %500 = vmatprep.subr.mxu0 0.0
    %501 = vmatpush2.msra.mxu0 0.0
    %502 = vmatprep.subr.mxu0 0.0
    %503 = vmatpush2.msra.mxu0 0.0
    %504 = vmatprep.subr.mxu0 0.0
    %505 = vmatpush2.msra.mxu0 0.0
    %506 = vmatprep.subr.mxu0 0.0
    %507 = vmatpush2.msra.mxu0 0.0
    %508 = vmatprep.subr.mxu0 0.0
    %509 = vmatpush2.msra.mxu0 0.0
    %510 = vmatprep.subr.mxu0 0.0
    %511 = vmatpush2.msra.mxu0 0.0
    %512 = vmatprep.mubr.f32.mxu0 0.0
    %513 = vmatmul.mubr.f32.gmra.mxu0 %v445
    %v514 = vpop.f32.mrf.mxu0
    %v515 = vadd.f32 0.0, %v514
    %v516 = vpop.f32.mrf.mxu0
    %517 = vdwg.mxu0
    %v518 = vadd.f32 %v447, %v515
    %v519 = vtanh.pop %v518
    %s520 = scalar_lea.vmem [#allocation2], 48
    %v521 = vld [vmem:[%s520] sm:$0xff]
    %522 = vmatprep.subr.mxu0 0.0
    %523 = vmatpush1.msra.mxu0 %v77
    %524 = vmatprep.subr.mxu0 0.0
    %525 = vmatpush1.msra.mxu0 %v76
    %526 = vmatprep.subr.mxu0 0.0
    %527 = vmatpush1.msra.mxu0 %v75
    %528 = vmatprep.subr.mxu0 0.0
    %529 = vmatpush1.msra.mxu0 %v74
    %530 = vmatprep.subr.mxu0 0.0
    %531 = vmatpush1.msra.mxu0 %v73
    %532 = vmatprep.subr.mxu0 0.0
    %533 = vmatpush1.msra.mxu0 %v72
    %534 = vmatprep.subr.mxu0 0.0
    %535 = vmatpush1.msra.mxu0 %v71
    %536 = vmatprep.subr.mxu0 0.0
    %537 = vmatpush1.msra.mxu0 %v70
    %538 = vmatprep.subr.mxu0 0.0
    %539 = vmatpush1.msra.mxu0 %v69
    %540 = vmatprep.subr.mxu0 0.0
    %541 = vmatpush1.msra.mxu0 %v68
    %542 = vmatprep.subr.mxu0 0.0
    %543 = vmatpush1.msra.mxu0 %v67
    %544 = vmatprep.subr.mxu0 0.0
    %545 = vmatpush1.msra.mxu0 %v66
    %546 = vmatprep.subr.mxu0 0.0
    %547 = vmatpush1.msra.mxu0 %v65
    %548 = vmatprep.subr.mxu0 0.0
    %549 = vmatpush1.msra.mxu0 %v64
    %550 = vmatprep.subr.mxu0 0.0
    %551 = vmatpush1.msra.mxu0 %v63
    %552 = vmatprep.subr.mxu0 0.0
    %553 = vmatpush1.msra.mxu0 %v62
    %554 = vmatprep.subr.mxu0 0.0
    %555 = vmatpush2.msra.mxu0 0.0
    %556 = vmatprep.subr.mxu0 0.0
    %557 = vmatpush2.msra.mxu0 0.0
    %558 = vmatprep.subr.mxu0 0.0
    %559 = vmatpush2.msra.mxu0 0.0
    %560 = vmatprep.subr.mxu0 0.0
    %561 = vmatpush2.msra.mxu0 0.0
    %562 = vmatprep.subr.mxu0 0.0
    %563 = vmatpush2.msra.mxu0 0.0
    %564 = vmatprep.subr.mxu0 0.0
    %565 = vmatpush2.msra.mxu0 0.0
    %566 = vmatprep.subr.mxu0 0.0
    %567 = vmatpush2.msra.mxu0 0.0
    %568 = vmatprep.subr.mxu0 0.0
    %569 = vmatpush2.msra.mxu0 0.0
    %570 = vmatprep.subr.mxu0 0.0
    %571 = vmatpush2.msra.mxu0 0.0
    %572 = vmatprep.subr.mxu0 0.0
    %573 = vmatpush2.msra.mxu0 0.0
    %574 = vmatprep.subr.mxu0 0.0
    %575 = vmatpush2.msra.mxu0 0.0
    %576 = vmatprep.subr.mxu0 0.0
    %577 = vmatpush2.msra.mxu0 0.0
    %578 = vmatprep.subr.mxu0 0.0
    %579 = vmatpush2.msra.mxu0 0.0
    %580 = vmatprep.subr.mxu0 0.0
    %581 = vmatpush2.msra.mxu0 0.0
    %582 = vmatprep.subr.mxu0 0.0
    %583 = vmatpush2.msra.mxu0 0.0
    %584 = vmatprep.subr.mxu0 0.0
    %585 = vmatpush2.msra.mxu0 0.0
    %586 = vmatprep.mubr.f32.mxu0 0.0
    %587 = vmatmul.mubr.f32.gmra.mxu0 %v519
    %v588 = vpop.f32.mrf.mxu0
    %v589 = vadd.f32 0.0, %v588
    %v590 = vpop.f32.mrf.mxu0
    %591 = vdwg.mxu0
    %v592 = vadd.f32 %v521, %v589
    %v593 = vtanh.pop %v592
    %s594 = scalar_lea.vmem [#allocation2], 56
    %v595 = vld [vmem:[%s594] sm:$0xff]
    %596 = vmatprep.subr.mxu0 0.0
    %597 = vmatpush1.msra.mxu0 %v77
    %598 = vmatprep.subr.mxu0 0.0
    %599 = vmatpush1.msra.mxu0 %v76
    %600 = vmatprep.subr.mxu0 0.0
    %601 = vmatpush1.msra.mxu0 %v75
    %602 = vmatprep.subr.mxu0 0.0
    %603 = vmatpush1.msra.mxu0 %v74
    %604 = vmatprep.subr.mxu0 0.0
    %605 = vmatpush1.msra.mxu0 %v73
    %606 = vmatprep.subr.mxu0 0.0
    %607 = vmatpush1.msra.mxu0 %v72
    %608 = vmatprep.subr.mxu0 0.0
    %609 = vmatpush1.msra.mxu0 %v71
    %610 = vmatprep.subr.mxu0 0.0
    %611 = vmatpush1.msra.mxu0 %v70
    %612 = vmatprep.subr.mxu0 0.0
    %613 = vmatpush1.msra.mxu0 %v69
    %614 = vmatprep.subr.mxu0 0.0
    %615 = vmatpush1.msra.mxu0 %v68
    %616 = vmatprep.subr.mxu0 0.0
    %617 = vmatpush1.msra.mxu0 %v67
    %618 = vmatprep.subr.mxu0 0.0
    %619 = vmatpush1.msra.mxu0 %v66
    %620 = vmatprep.subr.mxu0 0.0
    %621 = vmatpush1.msra.mxu0 %v65
    %622 = vmatprep.subr.mxu0 0.0
    %623 = vmatpush1.msra.mxu0 %v64
    %624 = vmatprep.subr.mxu0 0.0
    %625 = vmatpush1.msra.mxu0 %v63
    %626 = vmatprep.subr.mxu0 0.0
    %627 = vmatpush1.msra.mxu0 %v62
    %628 = vmatprep.subr.mxu0 0.0
    %629 = vmatpush2.msra.mxu0 0.0
    %630 = vmatprep.subr.mxu0 0.0
    %631 = vmatpush2.msra.mxu0 0.0
    %632 = vmatprep.subr.mxu0 0.0
    %633 = vmatpush2.msra.mxu0 0.0
    %634 = vmatprep.subr.mxu0 0.0
    %635 = vmatpush2.msra.mxu0 0.0
    %636 = vmatprep.subr.mxu0 0.0
    %637 = vmatpush2.msra.mxu0 0.0
    %638 = vmatprep.subr.mxu0 0.0
    %639 = vmatpush2.msra.mxu0 0.0
    %640 = vmatprep.subr.mxu0 0.0
    %641 = vmatpush2.msra.mxu0 0.0
    %642 = vmatprep.subr.mxu0 0.0
    %643 = vmatpush2.msra.mxu0 0.0
    %644 = vmatprep.subr.mxu0 0.0
    %645 = vmatpush2.msra.mxu0 0.0
    %646 = vmatprep.subr.mxu0 0.0
    %647 = vmatpush2.msra.mxu0 0.0
    %648 = vmatprep.subr.mxu0 0.0
    %649 = vmatpush2.msra.mxu0 0.0
    %650 = vmatprep.subr.mxu0 0.0
    %651 = vmatpush2.msra.mxu0 0.0
    %652 = vmatprep.subr.mxu0 0.0
    %653 = vmatpush2.msra.mxu0 0.0
    %654 = vmatprep.subr.mxu0 0.0
    %655 = vmatpush2.msra.mxu0 0.0
    %656 = vmatprep.subr.mxu0 0.0
    %657 = vmatpush2.msra.mxu0 0.0
    %658 = vmatprep.subr.mxu0 0.0
    %659 = vmatpush2.msra.mxu0 0.0
    %660 = vmatprep.mubr.f32.mxu0 0.0
    %661 = vmatmul.mubr.f32.gmra.mxu0 %v593
    %v662 = vpop.f32.mrf.mxu0
    %v663 = vadd.f32 0.0, %v662
    %v664 = vpop.f32.mrf.mxu0
    %665 = vdwg.mxu0
    %v666 = vadd.f32 %v595, %v663
    %v667 = vtanh.pop %v666
    %668 = vst [vmem:[#allocation8] sm:$0xff] %v667
    // Predicated region
    $region30: #{tpu_custom_call.1} parent=1 // pred_check
      _
    $region31: #{tpu_custom_call.1} parent=1 // pred_check_branch
      %670 = sbr.rel (0) target = $region33
    $region32: #{tpu_custom_call.1} parent=1 // pred_region
      %s672 = ssub.s32 128, 128
      %673 = vsyncadd [#allocation4], %s672
      %s675 = sshll.u32 [#allocation8], 4
      %s676 = int_to_ptr.vmem [resolvable:$true] %s675
      %678 = dma.vmem_to_hbm [thread:$0]  %s676, 128, %s3, [#allocation4]
    $region33: #{tpu_custom_call.1} parent=1 // pred_fallthru
      _
    // Predicated region
    $region34: #{tpu_custom_call.1} parent=1 // pred_check
      _
    $region35: #{tpu_custom_call.1} parent=1 // pred_check_branch
      %680 = sbr.rel (0) target = $region37
    $region36: #{tpu_custom_call.1} parent=1 // pred_region
      %681 = dma.done [#allocation4], 128
    $region37: #{tpu_custom_call.1} parent=1 // pred_fallthru
      _
    %682 = vsyncpa [#allocation3], 1
    %683 = vsyncpa [#allocation6], 1
    %684 = vsyncpa [#allocation4], 1

</llo_original>
